<compile_context>
chip_gen: v7x
topology: tpu7x:2x2x1
jax: 0.10.0
libtpu: 0.0.40
codegen_flags: <defaults>
</compile_context>

<pallas_src>
import functools
import math

import jax
import jax.numpy as jnp
from jax import lax
from jax.experimental import pallas as pl
from jax.experimental.pallas import tpu as pltpu


def _sdpa_kernel(q_ref, k_ref, v_ref, mask_ref, out_ref, attn_ref, *, inv_temperature):
    # Per-(batch, head-tile, q-tile) refs:
    #   q_ref:    (1, hc, lq, D)    k_ref / v_ref: (1, hc, L, D)
    #   mask_ref: (1, 1, lq, L)     out_ref: (1, hc, lq, D)   attn_ref: (1, hc, lq, L)
    q = q_ref[0]          # (hc, lq, D) -- native dtype (bf16 stays bf16 on the MXU)
    k = k_ref[0]
    v = v_ref[0]

    # scores[h, i, j] = sum_d q[h, i, d] * k[h, j, d]  -> (hc, lq, L), f32 accumulate.
    scores = lax.dot_general(
        q, k, (((2,), (2,)), ((0,), (0,))), preferred_element_type=jnp.float32
    )
    # Scale in f32 after the matmul: no extra rounding of bf16 q, hidden under MXU.
    scores = scores * jnp.float32(inv_temperature)

    # masked_fill(mask, -1e9); mask tile is (lq, L), broadcast across heads.
    masked = mask_ref[0, 0] != 0
    scores = jnp.where(masked[None, :, :], jnp.float32(-1000000000.0), scores)

    # Numerically-stable softmax over the last axis (f32).  Exact per-row reciprocal
    # so the stored attention matches F.softmax (rows sum to 1).
    s_max = jnp.max(scores, axis=-1, keepdims=True)
    p = jnp.exp(scores - s_max)
    denom = jnp.sum(p, axis=-1, keepdims=True)
    attn = p * (jnp.float32(1.0) / denom)

    # TODO(synk): attn_dropout=0.2 is identity in eval mode; training-mode dropout
    # would use pltpu.prng_seed + pltpu.stateful_bernoulli here.

    attn_ref[0] = attn.astype(attn_ref.dtype)

    # output[h, i, d] = sum_j attn[h, i, j] * v[h, j, d]
    out = lax.dot_general(
        attn.astype(v.dtype), v, (((2,), (1,)), ((0,), (0,))),
        preferred_element_type=jnp.float32,
    )
    out_ref[0] = out.astype(out_ref.dtype)


def scaled_dot_product_attention(q, k, v, mask, temperature, attn_dtype=None):
    """q, k, v: [B, H, L, D]; mask: [B, 1, L, L] (nonzero = masked).

    Pass the mask as int8/uint8/bool to avoid a per-call conversion pass.
    attn_dtype controls the dtype of the returned attention matrix (default:
    q.dtype); pass jnp.bfloat16 to halve the dominant [B,H,L,L] HBM writeback.
    """
    B, H, L, D = q.shape
    assert k.shape == (B, H, L, D) and v.shape == (B, H, L, D)
    assert mask.shape == (B, 1, L, L)
    attn_dtype = jnp.dtype(q.dtype) if attn_dtype is None else jnp.dtype(attn_dtype)

    # Mask: use the caller's small-int/bool mask directly when possible.
    if mask.dtype in (jnp.dtype(jnp.int8), jnp.dtype(jnp.uint8)):
        mask_i8 = mask
    else:
        mask_i8 = (mask != 0).astype(jnp.int8)

    # Query-tile size: whole L when small, otherwise 128-row tiles (MXU-friendly,
    # safe VMEM footprint on all generations).
    if L <= 128:
        lq = L
    elif L % 128 == 0:
        lq = 128
    else:
        lq = L
    n_q = L // lq

    # Head-tile size: largest divisor of H keeping the f32 (hc, lq, L) score
    # temporary within ~4 MiB -> bounded VMEM on v7x, no spills elsewhere.
    budget = 4 * 1024 * 1024
    cap = max(1, budget // (lq * L * 4))
    hc = 1
    for d in range(1, H + 1):
        if H % d == 0 and d <= cap:
            hc = d
    n_h = H // hc

    kernel = functools.partial(_sdpa_kernel, inv_temperature=1.0 / float(temperature))

    q_spec = pl.BlockSpec((1, hc, lq, D), lambda b, hi, qi: (b, hi, qi, 0))
    # K/V blocks ignore the q-tile index -> resident across the innermost q axis.
    kv_spec = pl.BlockSpec((1, hc, L, D), lambda b, hi, qi: (b, hi, 0, 0))
    # Mask block ignores the head-tile index -> shared across heads.
    mask_spec = pl.BlockSpec((1, 1, lq, L), lambda b, hi, qi: (b, 0, qi, 0))
    out_spec = pl.BlockSpec((1, hc, lq, D), lambda b, hi, qi: (b, hi, qi, 0))
    attn_spec = pl.BlockSpec((1, hc, lq, L), lambda b, hi, qi: (b, hi, qi, 0))

    # VMEM budget from the actual tile footprint (double-buffered blocks + f32 temps),
    # with headroom; never below the 32 MiB scoped default, never above 64 MiB (v7x).
    in_b = jnp.dtype(q.dtype).itemsize
    out_b = jnp.dtype(q.dtype).itemsize
    attn_b = attn_dtype.itemsize
    blk_bytes = (hc * lq * D * in_b            # q
                 + 2 * hc * L * D * in_b       # k, v
                 + lq * L                      # mask (int8)
                 + hc * lq * D * out_b         # out
                 + hc * lq * L * attn_b)       # attn
    tmp_bytes = 2 * hc * lq * L * 4            # f32 scores + p
    footprint = 2 * blk_bytes + tmp_bytes
    vmem_limit = int(min(64 * 1024 * 1024,
                         max(32 * 1024 * 1024, (footprint * 3) // 2)))

    cost = pl.CostEstimate(
        flops=4 * B * H * L * L * D,
        transcendentals=B * H * L * L,
        bytes_accessed=(3 * B * H * L * D * in_b
                        + B * L * L
                        + B * H * L * D * out_b
                        + B * H * L * L * attn_b),
    )

    out, attn = pl.pallas_call(
        kernel,
        out_shape=(
            jax.ShapeDtypeStruct((B, H, L, D), q.dtype),
            jax.ShapeDtypeStruct((B, H, L, L), attn_dtype),
        ),
        grid_spec=pltpu.PrefetchScalarGridSpec(
            num_scalar_prefetch=0,
            grid=(B, n_h, n_q),
            in_specs=[q_spec, kv_spec, kv_spec, mask_spec],
            out_specs=[out_spec, attn_spec],
        ),
        compiler_params=pltpu.CompilerParams(
            dimension_semantics=("parallel", "parallel", "arbitrary"),
            vmem_limit_bytes=vmem_limit,
        ),
        cost_estimate=cost,
    )(q, k, v, mask_i8)
    return out, attn


def _reference(q, k, v, mask, temperature):
    scores = jnp.einsum("bhld,bhmd->bhlm", q / temperature, k)
    scores = jnp.where(mask != 0, -1000000000.0, scores)
    attn = jax.nn.softmax(scores, axis=-1)
    out = jnp.einsum("bhlm,bhmd->bhld", attn, v)
    return out, attn


if __name__ == "__main__":
    B, H, L, D = 2, 4, 8, 32
    temperature = math.sqrt(D)

    key = jax.random.PRNGKey(0)
    kq, kk, kv = jax.random.split(key, 3)
    q = jax.random.normal(kq, (B, H, L, D), dtype=jnp.float32)
    k = jax.random.normal(kk, (B, H, L, D), dtype=jnp.float32)
    v = jax.random.normal(kv, (B, H, L, D), dtype=jnp.float32)

    # Causal mask, built directly as int8 (nonzero above the diagonal == masked),
    # broadcast over heads -- no per-call conversion pass in the wrapper.
    causal = jnp.triu(jnp.ones((L, L), dtype=jnp.int8), k=1)
    mask = jnp.broadcast_to(causal[None, None, :, :], (B, 1, L, L))

    out, attn = scaled_dot_product_attention(q, k, v, mask, temperature)
    jax.block_until_ready((out, attn))

    ref_out, ref_attn = _reference(q, k, v, mask, temperature)
    assert jnp.allclose(out, ref_out, atol=1e-4, rtol=1e-4)
    assert jnp.allclose(attn, ref_attn, atol=1e-4, rtol=1e-4)

    print("KERNEL_OK")
</pallas_src>

<mosaic_0001>
module attributes {stable_mosaic.version = 11 : i64} {
  func.func @_sdpa_kernel(%arg0: i32, %arg1: i32, %arg2: i32, %arg3: memref<1x4x8x32xf32, #tpu.memory_space<vmem>>, %arg4: memref<1x4x8x32xf32, #tpu.memory_space<vmem>>, %arg5: memref<1x4x8x32xf32, #tpu.memory_space<vmem>>, %arg6: memref<1x1x8x8xi8, #tpu.memory_space<vmem>>, %arg7: memref<1x4x8x32xf32, #tpu.memory_space<vmem>>, %arg8: memref<1x4x8x8xf32, #tpu.memory_space<vmem>>) attributes {dimension_semantics = [#tpu.dimension_semantics<parallel>, #tpu.dimension_semantics<parallel>, #tpu.dimension_semantics<arbitrary>], iteration_bounds = array<i64: 2, 1, 1>, scalar_prefetch = 0 : i64, scratch_operands = 0 : i64, tpu.core_type = #tpu.core_type<tc>, window_params = [{transform_indices = @transform_0, window_bounds = array<i64: 1, 4, 8, 32>}, {transform_indices = @transform_1, window_bounds = array<i64: 1, 4, 8, 32>}, {transform_indices = @transform_2, window_bounds = array<i64: 1, 4, 8, 32>}, {transform_indices = @transform_3, window_bounds = array<i64: 1, 1, 8, 8>}, {transform_indices = @transform_4, window_bounds = array<i64: 1, 4, 8, 32>}, {transform_indices = @transform_5, window_bounds = array<i64: 1, 4, 8, 8>}]} {
    %c0 = arith.constant 0 : index
    %c0_0 = arith.constant 0 : index
    %c0_1 = arith.constant 0 : index
    %c0_2 = arith.constant 0 : index
    %0 = vector.load %arg3[%c0, %c0_0, %c0_1, %c0_2] : memref<1x4x8x32xf32, #tpu.memory_space<vmem>>, vector<1x4x8x32xf32>
    %1 = vector.shape_cast %0 : vector<1x4x8x32xf32> to vector<4x8x32xf32>
    %c0_3 = arith.constant 0 : index
    %c0_4 = arith.constant 0 : index
    %c0_5 = arith.constant 0 : index
    %c0_6 = arith.constant 0 : index
    %2 = vector.load %arg4[%c0_3, %c0_4, %c0_5, %c0_6] : memref<1x4x8x32xf32, #tpu.memory_space<vmem>>, vector<1x4x8x32xf32>
    %3 = vector.shape_cast %2 : vector<1x4x8x32xf32> to vector<4x8x32xf32>
    %c0_7 = arith.constant 0 : index
    %c0_8 = arith.constant 0 : index
    %c0_9 = arith.constant 0 : index
    %c0_10 = arith.constant 0 : index
    %4 = vector.load %arg5[%c0_7, %c0_8, %c0_9, %c0_10] : memref<1x4x8x32xf32, #tpu.memory_space<vmem>>, vector<1x4x8x32xf32>
    %5 = vector.shape_cast %4 : vector<1x4x8x32xf32> to vector<4x8x32xf32>
    %cst = arith.constant dense<0.000000e+00> : vector<4x8x8xf32>
    %6 = tpu.matmul %1, %3, %cst {dimension_numbers = #tpu.dot_dimension_numbers<[2], [2], [1], [1], [0, 0, 0, 1, 1, 1], [0], [0]>} : vector<4x8x32xf32>, vector<4x8x32xf32>, vector<4x8x8xf32> -> vector<4x8x8xf32>
    %cst_11 = arith.constant 0.176776692 : f32
    %7 = vector.broadcast %cst_11 : f32 to vector<4x8x8xf32>
    %8 = arith.mulf %6, %7 : vector<4x8x8xf32>
    %c0_12 = arith.constant 0 : index
    %c0_13 = arith.constant 0 : index
    %c0_14 = arith.constant 0 : index
    %c0_15 = arith.constant 0 : index
    %9 = vector.load %arg6[%c0_12, %c0_13, %c0_14, %c0_15] : memref<1x1x8x8xi8, #tpu.memory_space<vmem>>, vector<1x1x8x8xi8>
    %10 = vector.shape_cast %9 : vector<1x1x8x8xi8> to vector<8x8xi8>
    %c0_i8 = arith.constant 0 : i8
    %11 = vector.broadcast %c0_i8 : i8 to vector<8x8xi8>
    %12 = arith.cmpi ne, %10, %11 : vector<8x8xi8>
    %13 = vector.shape_cast %12 : vector<8x8xi1> to vector<1x8x8xi1>
    %cst_16 = arith.constant -1.000000e+09 : f32
    %14 = vector.shape_cast %13 : vector<1x8x8xi1> to vector<1x8x8xi1>
    %15 = vector.broadcast %14 : vector<1x8x8xi1> to vector<4x8x8xi1>
    %16 = vector.broadcast %cst_16 : f32 to vector<4x8x8xf32>
    %17 = arith.select %15, %16, %8 : vector<4x8x8xi1>, vector<4x8x8xf32>
    %cst_17 = arith.constant dense<0xFF800000> : vector<4x8xf32>
    %18 = vector.multi_reduction <maximumf>, %17, %cst_17 [2] : vector<4x8x8xf32> to vector<4x8xf32>
    %19 = vector.shape_cast %18 : vector<4x8xf32> to vector<4x8x1xf32>
    %20 = vector.broadcast %19 : vector<4x8x1xf32> to vector<4x8x8xf32>
    %21 = arith.subf %17, %20 : vector<4x8x8xf32>
    %22 = math.exp %21 : vector<4x8x8xf32>
    %cst_18 = arith.constant dense<0.000000e+00> : vector<4x8xf32>
    %23 = vector.multi_reduction <add>, %22, %cst_18 [2] : vector<4x8x8xf32> to vector<4x8xf32>
    %24 = vector.shape_cast %23 : vector<4x8xf32> to vector<4x8x1xf32>
    %cst_19 = arith.constant 1.000000e+00 : f32
    %25 = vector.broadcast %cst_19 : f32 to vector<4x8x1xf32>
    %26 = arith.divf %25, %24 : vector<4x8x1xf32>
    %27 = vector.broadcast %26 : vector<4x8x1xf32> to vector<4x8x8xf32>
    %28 = arith.mulf %22, %27 : vector<4x8x8xf32>
    %c0_20 = arith.constant 0 : index
    %c0_21 = arith.constant 0 : index
    %c0_22 = arith.constant 0 : index
    %c0_23 = arith.constant 0 : index
    %29 = vector.load %arg8[%c0_20, %c0_21, %c0_22, %c0_23] : memref<1x4x8x8xf32, #tpu.memory_space<vmem>>, vector<1x4x8x8xf32>
    %30 = vector.shape_cast %29 : vector<1x4x8x8xf32> to vector<4x8x8xf32>
    %31 = vector.shape_cast %28 : vector<4x8x8xf32> to vector<1x4x8x8xf32>
    tpu.vector_store %arg8[%c0_20, %c0_21, %c0_22, %c0_23], %31 {strides = array<i32>} : memref<1x4x8x8xf32, #tpu.memory_space<vmem>>, vector<1x4x8x8xf32>,
    %cst_24 = arith.constant dense<0.000000e+00> : vector<4x8x32xf32>
    %32 = tpu.matmul %28, %5, %cst_24 {dimension_numbers = #tpu.dot_dimension_numbers<[2], [1], [1], [2], [0, 0, 0, 1, 1, 2], [0], [0]>} : vector<4x8x8xf32>, vector<4x8x32xf32>, vector<4x8x32xf32> -> vector<4x8x32xf32>
    %c0_25 = arith.constant 0 : index
    %c0_26 = arith.constant 0 : index
    %c0_27 = arith.constant 0 : index
    %c0_28 = arith.constant 0 : index
    %33 = vector.load %arg7[%c0_25, %c0_26, %c0_27, %c0_28] : memref<1x4x8x32xf32, #tpu.memory_space<vmem>>, vector<1x4x8x32xf32>
    %34 = vector.shape_cast %33 : vector<1x4x8x32xf32> to vector<4x8x32xf32>
    %35 = vector.shape_cast %32 : vector<4x8x32xf32> to vector<1x4x8x32xf32>
    tpu.vector_store %arg7[%c0_25, %c0_26, %c0_27, %c0_28], %35 {strides = array<i32>} : memref<1x4x8x32xf32, #tpu.memory_space<vmem>>, vector<1x4x8x32xf32>,
    return
  }
  func.func @transform_0(%arg0: i32, %arg1: i32, %arg2: i32) -> (i32, i32, i32, i32) {
    %c0_i32 = arith.constant 0 : i32
    %c0_i32_0 = arith.constant 0 : i32
    return %arg0, %arg1, %arg2, %c0_i32 : i32, i32, i32, i32
  }
  func.func @transform_1(%arg0: i32, %arg1: i32, %arg2: i32) -> (i32, i32, i32, i32) {
    %c0_i32 = arith.constant 0 : i32
    %c0_i32_0 = arith.constant 0 : i32
    %c0_i32_1 = arith.constant 0 : i32
    return %arg0, %arg1, %c0_i32, %c0_i32_0 : i32, i32, i32, i32
  }
  func.func @transform_2(%arg0: i32, %arg1: i32, %arg2: i32) -> (i32, i32, i32, i32) {
    %c0_i32 = arith.constant 0 : i32
    %c0_i32_0 = arith.constant 0 : i32
    %c0_i32_1 = arith.constant 0 : i32
    return %arg0, %arg1, %c0_i32, %c0_i32_0 : i32, i32, i32, i32
  }
  func.func @transform_3(%arg0: i32, %arg1: i32, %arg2: i32) -> (i32, i32, i32, i32) {
    %c0_i32 = arith.constant 0 : i32
    %c0_i32_0 = arith.constant 0 : i32
    %c0_i32_1 = arith.constant 0 : i32
    return %arg0, %c0_i32, %arg2, %c0_i32_0 : i32, i32, i32, i32
  }
  func.func @transform_4(%arg0: i32, %arg1: i32, %arg2: i32) -> (i32, i32, i32, i32) {
    %c0_i32 = arith.constant 0 : i32
    %c0_i32_0 = arith.constant 0 : i32
    return %arg0, %arg1, %arg2, %c0_i32 : i32, i32, i32, i32
  }
  func.func @transform_5(%arg0: i32, %arg1: i32, %arg2: i32) -> (i32, i32, i32, i32) {
    %c0_i32 = arith.constant 0 : i32
    %c0_i32_0 = arith.constant 0 : i32
    return %arg0, %arg1, %arg2, %c0_i32 : i32, i32, i32, i32
  }
}

</mosaic_0001>

<llo_original>
// kernel: tpu_custom_call.1
$region0: #{tpu_custom_call.1}
  #allocation0 [shape = 'u32[]', space=smem, size = 0x4, offset = 0x4, fixed_abs, tag = 'smem constant byte address 0x4 - core index']
  #allocation1 [shape = 'u32[144,128]{1,0:T(1,128)}', space=vmem, size = 0x12000, scoped, tag = 'internal scratch']
  %s0 = inlined_call_operand.hbm [shape: f32[2,4,8,32], index: 0, kind: input, shape index: {}]
  %s1 = inlined_call_operand.hbm [shape: f32[2,4,8,32], index: 1, kind: input, shape index: {}]
  %s2 = inlined_call_operand.hbm [shape: f32[2,4,8,32], index: 2, kind: input, shape index: {}]
  %s3 = inlined_call_operand.vmem [shape: s8[2,1,8,8], index: 3, kind: input, shape index: {}]
  %s4 = inlined_call_operand.hbm [shape: f32[2,4,8,32], index: 4, kind: output, shape index: {0}]
  %s5 = inlined_call_operand.hbm [shape: f32[2,4,8,8], index: 5, kind: output, shape index: {1}]
  %6 = xla_tuple %s4, %s5
  %s7 = sld [smem:[#allocation0]]
  $region69: #{tpu_custom_call.1} parent=0
    _
  %s9 = ssub.s32 1, %s7
  %s10 = scalar_select 0, %s9, %s7
  $region1: #{tpu_custom_call.1} parent=0
    #allocation2 [shape = 'u8[32768]{0}', space=vmem, size = 0x8000, scoped, tag = 'input window, operand 0']
    #allocation3 [shape = 's32[2]{0}', space=sflag, size = 0x8, scoped, tag = 'scoped memory for tpu_custom_call.1']
    #allocation4 [shape = 's32[2]{0}', space=sflag, size = 0x8, scoped, tag = 'scoped memory for tpu_custom_call.1']
    #allocation5 [shape = 'u8[32768]{0}', space=vmem, size = 0x8000, scoped, tag = 'input window, operand 1']
    #allocation6 [shape = 's32[2]{0}', space=sflag, size = 0x8, scoped, tag = 'scoped memory for tpu_custom_call.1']
    #allocation7 [shape = 'u8[32768]{0}', space=vmem, size = 0x8000, scoped, tag = 'input window, operand 2']
    #allocation8 [shape = 'u8[32768]{0}', space=vmem, size = 0x8000, scoped, tag = 'output window, operand 0']
    #allocation9 [shape = 'u8[32768]{0}', space=vmem, size = 0x8000, scoped, tag = 'output window, operand 1']
    #allocation10 [shape = 's32[2]{0}', space=sflag, size = 0x8, scoped, tag = 'scoped memory for tpu_custom_call.1']
    %11 = vsyncpa [#allocation3], 0
    %s12 = scalar_lea.sflag [#allocation3], 1
    %13 = vsyncpa %s12, 0
    %14 = vsyncpa [#allocation6], 0
    %s15 = scalar_lea.sflag [#allocation6], 1
    %16 = vsyncpa %s15, 0
    %17 = vsyncpa [#allocation4], 0
    %s18 = scalar_lea.sflag [#allocation4], 1
    %19 = vsyncpa %s18, 0
    %20 = vsyncpa [#allocation10], 0
    %s21 = scalar_lea.sflag [#allocation10], 1
    %22 = vsyncpa %s21, 0
    loop: start=0, step=1, limit=4
    $region2: #{tpu_custom_call.1} parent=1 // loop_pre_header
      _
    $region3: #{tpu_custom_call.1} parent=1 // loop_header
      %s24 = sphi 0, %s28
      %p25 = scmp.ge.s32.totalorder %s24, 4
      %s31 = sphi 0, %s50
      %s32 = sphi 0, %s46
      %s33 = sphi 0, %s42
      %s34 = sphi 0, %s31
      %s35 = sphi 0, %s32
      %s36 = sphi 0, %s33
      %s37 = sphi 0, %s34
      %s38 = sphi 0, %s35
      %s39 = sphi 0, %s36
      %s57 = sphi 0, %s59
      %s60 = sphi 0, %s57
      %s61 = sphi 0, %s60
      %s77 = sphi 0, %s61
      %s85 = sphi 0, %s87
      %s88 = sphi 0, %s85
      %s89 = sphi 0, %s88
      %s105 = sphi 0, %s89
      %s113 = sphi 0, %s115
      %s116 = sphi 0, %s113
      %s117 = sphi 0, %s116
      %s133 = sphi 0, %s117
      %s141 = sphi 0, %s143
      %s144 = sphi 0, %s141
      %s145 = sphi 0, %s144
      %s161 = sphi 0, %s145
      %s171 = sphi 0, %s173
      %s174 = sphi 0, %s171
      %s175 = sphi 0, %s174
      %s191 = sphi 0, %s175
      %s201 = sphi 0, %s203
      %s204 = sphi 0, %s201
      %s205 = sphi 0, %s204
      %s221 = sphi 0, %s205
    $region4: #{tpu_custom_call.1} parent=1 // loop_header_branch
      %27 = sbr.rel (%p25) target = $region8
    $region5: #{tpu_custom_call.1} parent=1 // loop_body
      %s29 = ssub.s32 %s24, 1
      %s30 = ssub.s32 %s24, 2
      %s40 = sadd.s32 1, %s33
      %p41 = scmp.ge.s32.totalorder %s40, 1
      %s42 = scalar_select %p41, 0, %s40
      %s43 = sadd.s32 1, %s32
      %s44 = scalar_select %p41, %s43, %s32
      %p45 = scmp.ge.s32.totalorder %s44, 1
      %s46 = scalar_select %p45, 0, %s44
      %s47 = sadd.s32 1, %s31
      %s48 = scalar_select %p45, %s47, %s31
      %p49 = scmp.ge.s32.totalorder %s48, 2
      %s50 = scalar_select %p49, 0, %s48
      %s51 = ssub.s32 %s31, %s50
      %s52 = ssub.s32 %s32, %s46
      %s53 = sor.u32 %s51, %s52
      %s54 = ssub.s32 %s33, %s42
      %s55 = sor.u32 %s53, %s54
      %p56 = scmp.eq.s32.totalorder %s55, 0
      %s58 = sadd.s32 %s57, 1
      %s59 = scalar_select %p56, %s57, %s58
      %p62 = pneg %p56
      %p63 = scmp.eq.s32.totalorder %s24, 1
      %p64 = por %p62, %p63
      %p65 = scmp.ne.s32.totalorder %s57, %s60
      %p66 = scmp.eq.s32.totalorder %s24, 0
      %p67 = por %p65, %p66
      %p68 = scmp.ne.s32.totalorder %s57, %s60
      %p69 = scmp.eq.s32.totalorder %s29, 1
      %p70 = por %p68, %p69
      %p71 = scmp.ne.s32.totalorder %s60, %s61
      %p72 = scmp.eq.s32.totalorder %s29, 0
      %p73 = por %p71, %p72
      %p74 = scmp.ne.s32.totalorder %s60, %s61
      %p75 = scmp.eq.s32.totalorder %s30, 1
      %p76 = por %p74, %p75
      %p78 = scmp.ne.s32.totalorder %s61, %s77
      %p79 = scmp.eq.s32.totalorder %s30, 0
      %p80 = por %p78, %p79
      %s81 = ssub.s32 %s31, %s50
      %s82 = ssub.s32 %s32, %s46
      %s83 = sor.u32 %s81, %s82
      %p84 = scmp.eq.s32.totalorder %s83, 0
      %s86 = sadd.s32 %s85, 1
      %s87 = scalar_select %p84, %s85, %s86
      %p90 = pneg %p84
      %p91 = scmp.eq.s32.totalorder %s24, 1
      %p92 = por %p90, %p91
      %p93 = scmp.ne.s32.totalorder %s85, %s88
      %p94 = scmp.eq.s32.totalorder %s24, 0
      %p95 = por %p93, %p94
      %p96 = scmp.ne.s32.totalorder %s85, %s88
      %p97 = scmp.eq.s32.totalorder %s29, 1
      %p98 = por %p96, %p97
      %p99 = scmp.ne.s32.totalorder %s88, %s89
      %p100 = scmp.eq.s32.totalorder %s29, 0
      %p101 = por %p99, %p100
      %p102 = scmp.ne.s32.totalorder %s88, %s89
      %p103 = scmp.eq.s32.totalorder %s30, 1
      %p104 = por %p102, %p103
      %p106 = scmp.ne.s32.totalorder %s89, %s105
      %p107 = scmp.eq.s32.totalorder %s30, 0
      %p108 = por %p106, %p107
      %s109 = ssub.s32 %s31, %s50
      %s110 = ssub.s32 %s32, %s46
      %s111 = sor.u32 %s109, %s110
      %p112 = scmp.eq.s32.totalorder %s111, 0
      %s114 = sadd.s32 %s113, 1
      %s115 = scalar_select %p112, %s113, %s114
      %p118 = pneg %p112
      %p119 = scmp.eq.s32.totalorder %s24, 1
      %p120 = por %p118, %p119
      %p121 = scmp.ne.s32.totalorder %s113, %s116
      %p122 = scmp.eq.s32.totalorder %s24, 0
      %p123 = por %p121, %p122
      %p124 = scmp.ne.s32.totalorder %s113, %s116
      %p125 = scmp.eq.s32.totalorder %s29, 1
      %p126 = por %p124, %p125
      %p127 = scmp.ne.s32.totalorder %s116, %s117
      %p128 = scmp.eq.s32.totalorder %s29, 0
      %p129 = por %p127, %p128
      %p130 = scmp.ne.s32.totalorder %s116, %s117
      %p131 = scmp.eq.s32.totalorder %s30, 1
      %p132 = por %p130, %p131
      %p134 = scmp.ne.s32.totalorder %s117, %s133
      %p135 = scmp.eq.s32.totalorder %s30, 0
      %p136 = por %p134, %p135
      %s137 = ssub.s32 %s31, %s50
      %s138 = ssub.s32 %s33, %s42
      %s139 = sor.u32 %s137, %s138
      %p140 = scmp.eq.s32.totalorder %s139, 0
      %s142 = sadd.s32 %s141, 1
      %s143 = scalar_select %p140, %s141, %s142
      %p146 = pneg %p140
      %p147 = scmp.eq.s32.totalorder %s24, 1
      %p148 = por %p146, %p147
      %p149 = scmp.ne.s32.totalorder %s141, %s144
      %p150 = scmp.eq.s32.totalorder %s24, 0
      %p151 = por %p149, %p150
      %p152 = scmp.ne.s32.totalorder %s141, %s144
      %p153 = scmp.eq.s32.totalorder %s29, 1
      %p154 = por %p152, %p153
      %p155 = scmp.ne.s32.totalorder %s144, %s145
      %p156 = scmp.eq.s32.totalorder %s29, 0
      %p157 = por %p155, %p156
      %p158 = scmp.ne.s32.totalorder %s144, %s145
      %p159 = scmp.eq.s32.totalorder %s30, 1
      %p160 = por %p158, %p159
      %p162 = scmp.ne.s32.totalorder %s145, %s161
      %p163 = scmp.eq.s32.totalorder %s30, 0
      %p164 = por %p162, %p163
      %s165 = ssub.s32 %s31, %s50
      %s166 = ssub.s32 %s32, %s46
      %s167 = sor.u32 %s165, %s166
      %s168 = ssub.s32 %s33, %s42
      %s169 = sor.u32 %s167, %s168
      %p170 = scmp.eq.s32.totalorder %s169, 0
      %s172 = sadd.s32 %s171, 1
      %s173 = scalar_select %p170, %s171, %s172
      %p176 = pneg %p170
      %p177 = scmp.eq.s32.totalorder %s24, 1
      %p178 = por %p176, %p177
      %p179 = scmp.ne.s32.totalorder %s171, %s174
      %p180 = scmp.eq.s32.totalorder %s24, 0
      %p181 = por %p179, %p180
      %p182 = scmp.ne.s32.totalorder %s171, %s174
      %p183 = scmp.eq.s32.totalorder %s29, 1
      %p184 = por %p182, %p183
      %p185 = scmp.ne.s32.totalorder %s174, %s175
      %p186 = scmp.eq.s32.totalorder %s29, 0
      %p187 = por %p185, %p186
      %p188 = scmp.ne.s32.totalorder %s174, %s175
      %p189 = scmp.eq.s32.totalorder %s30, 1
      %p190 = por %p188, %p189
      %p192 = scmp.ne.s32.totalorder %s175, %s191
      %p193 = scmp.eq.s32.totalorder %s30, 0
      %p194 = por %p192, %p193
      %s195 = ssub.s32 %s31, %s50
      %s196 = ssub.s32 %s32, %s46
      %s197 = sor.u32 %s195, %s196
      %s198 = ssub.s32 %s33, %s42
      %s199 = sor.u32 %s197, %s198
      %p200 = scmp.eq.s32.totalorder %s199, 0
      %s202 = sadd.s32 %s201, 1
      %s203 = scalar_select %p200, %s201, %s202
      %p206 = pneg %p200
      %p207 = scmp.eq.s32.totalorder %s24, 1
      %p208 = por %p206, %p207
      %p209 = scmp.ne.s32.totalorder %s201, %s204
      %p210 = scmp.eq.s32.totalorder %s24, 0
      %p211 = por %p209, %p210
      %p212 = scmp.ne.s32.totalorder %s201, %s204
      %p213 = scmp.eq.s32.totalorder %s29, 1
      %p214 = por %p212, %p213
      %p215 = scmp.ne.s32.totalorder %s204, %s205
      %p216 = scmp.eq.s32.totalorder %s29, 0
      %p217 = por %p215, %p216
      %p218 = scmp.ne.s32.totalorder %s204, %s205
      %p219 = scmp.eq.s32.totalorder %s30, 1
      %p220 = por %p218, %p219
      %p222 = scmp.ne.s32.totalorder %s205, %s221
      %p223 = scmp.eq.s32.totalorder %s30, 0
      %p224 = por %p222, %p223
      %p225 = scmp.le.s32.totalorder 1, %s24
      %p226 = scmp.lt.s32.totalorder %s24, 3
      %p227 = pnand %p225, %p226
      %p228 = pneg %p227
      // Predicated region
      $region9: #{tpu_custom_call.1} parent=5 // pred_check
        _
      $region10: #{tpu_custom_call.1} parent=5 // pred_check_branch
        %230 = sbr.rel (%p227) target = $region12
      $region11: #{tpu_custom_call.1} parent=5 // pred_region
        %s231 = ssub.s32 %s24, 1
      $region12: #{tpu_custom_call.1} parent=5 // pred_fallthru
        _
      %p232 = scmp.lt.s32.totalorder %s24, 2
      // Predicated region
      $region13: #{tpu_custom_call.1} parent=5 // pred_check
        %p233 = pneg %p232
      $region14: #{tpu_custom_call.1} parent=5 // pred_check_branch
        %235 = sbr.rel (%p233) target = $region16
      $region15: #{tpu_custom_call.1} parent=5 // pred_region
        // Predicated region
        $region17: #{tpu_custom_call.1} parent=15 // pred_check
          %p236 = pneg %p67
        $region18: #{tpu_custom_call.1} parent=15 // pred_check_branch
          %238 = sbr.rel (%p236) target = $region20
        $region19: #{tpu_custom_call.1} parent=15 // pred_region
          %s239 = sand.u32 %s57, 1
          %s240 = scalar_lea.sflag [#allocation3], %s239
          %s241 = sand.u32 %s57, 1
          %s242 = smul.addr %s241, 32
          %s243 = scalar_lea.vmem [#allocation2], %s242
          %s244 = smul.u32 4, %s32
          %s246 = ssub.s32 512, 512
          %247 = vsyncadd %s240, %s246
          %s248 = sadd.s32 %s33, %s244
          %s249 = smul.addr %s31, 4
          %s250 = sadd.s32 %s248, %s249
          %s251 = smul.addr %s250, 128
          %s252 = scalar_lea.hbm %s0, %s251
          %s253 = sshll.u32 %s243, 4
          %s254 = int_to_ptr.vmem [resolvable:$true] %s253
          %259 = dma.hbm_to_vmem [thread:$0]  %s252, 512, %s254, %s240, 128, 128, 8
        $region20: #{tpu_custom_call.1} parent=15 // pred_fallthru
          _
        // Predicated region
        $region21: #{tpu_custom_call.1} parent=15 // pred_check
          %p260 = pneg %p95
        $region22: #{tpu_custom_call.1} parent=15 // pred_check_branch
          %262 = sbr.rel (%p260) target = $region24
        $region23: #{tpu_custom_call.1} parent=15 // pred_region
          %s263 = sand.u32 %s24, 1
          %s264 = scalar_lea.sflag [#allocation6], %s263
          %s265 = sand.u32 %s85, 1
          %s266 = smul.addr %s265, 32
          %s267 = scalar_lea.vmem [#allocation5], %s266
          %s268 = smul.u32 4, %s32
          %s270 = ssub.s32 512, 512
          %271 = vsyncadd %s264, %s270
          %s272 = smul.addr %s31, 4
          %s273 = sadd.s32 %s268, %s272
          %s274 = smul.addr %s273, 128
          %s275 = scalar_lea.hbm %s1, %s274
          %s276 = sshll.u32 %s267, 4
          %s277 = int_to_ptr.vmem [resolvable:$true] %s276
          %282 = dma.hbm_to_vmem [thread:$0]  %s275, 512, %s277, %s264, 128, 128, 8
        $region24: #{tpu_custom_call.1} parent=15 // pred_fallthru
          _
        // Predicated region
        $region25: #{tpu_custom_call.1} parent=15 // pred_check
          %p283 = pneg %p123
        $region26: #{tpu_custom_call.1} parent=15 // pred_check_branch
          %285 = sbr.rel (%p283) target = $region28
        $region27: #{tpu_custom_call.1} parent=15 // pred_region
          %s286 = sand.u32 %s24, 1
          %s287 = scalar_lea.sflag [#allocation6], %s286
          %s288 = sand.u32 %s113, 1
          %s289 = smul.addr %s288, 32
          %s290 = scalar_lea.vmem [#allocation7], %s289
          %s291 = smul.u32 4, %s32
          %s293 = ssub.s32 512, 512
          %294 = vsyncadd %s287, %s293
          %s295 = smul.addr %s31, 4
          %s296 = sadd.s32 %s291, %s295
          %s297 = smul.addr %s296, 128
          %s298 = scalar_lea.hbm %s2, %s297
          %s299 = sshll.u32 %s290, 4
          %s300 = int_to_ptr.vmem [resolvable:$true] %s299
          %305 = dma.hbm_to_vmem [thread:$0]  %s298, 512, %s300, %s287, 128, 128, 8
        $region28: #{tpu_custom_call.1} parent=15 // pred_fallthru
          _
        // Predicated region
        $region29: #{tpu_custom_call.1} parent=15 // pred_check
          %p306 = pneg %p151
        $region30: #{tpu_custom_call.1} parent=15 // pred_check_branch
          %308 = sbr.rel (%p306) target = $region32
        $region31: #{tpu_custom_call.1} parent=15 // pred_region
          %p309 = scmp.lt.s32.totalorder %s31, 1
          %s310 = scalar_select %p309, %s31, 1
          %p311 = scmp.lt.s32.totalorder %s33, 0
          %s312 = scalar_select %p311, %s33, 0
          %s313 = sadd.s32 %s312, %s310
          %s314 = smul.addr %s313, 2
          %s315 = scalar_lea.vmem %s3, %s314
        $region32: #{tpu_custom_call.1} parent=15 // pred_fallthru
          _
      $region16: #{tpu_custom_call.1} parent=5 // pred_fallthru
        _
      %p316 = scmp.le.s32.totalorder 1, %s24
      %p317 = scmp.lt.s32.totalorder %s24, 3
      %p318 = pnand %p316, %p317
      %p319 = pneg %p318
      // Predicated region
      $region33: #{tpu_custom_call.1} parent=5 // pred_check
        _
      $region34: #{tpu_custom_call.1} parent=5 // pred_check_branch
        %321 = sbr.rel (%p318) target = $region36
      $region35: #{tpu_custom_call.1} parent=5 // pred_region
        %s322 = ssub.s32 %s24, 1
        %s323 = sand.u32 %s60, 1
        %s324 = scalar_lea.sflag [#allocation3], %s323
        %s325 = sand.u32 %s60, 1
        %s326 = smul.addr %s325, 32
        %s327 = scalar_lea.vmem [#allocation2], %s326
        // Predicated region
        $region37: #{tpu_custom_call.1} parent=35 // pred_check
          %p328 = pneg %p73
        $region38: #{tpu_custom_call.1} parent=35 // pred_check_branch
          %330 = sbr.rel (%p328) target = $region40
        $region39: #{tpu_custom_call.1} parent=35 // pred_region
          %331 = dma.done %s324, 512
        $region40: #{tpu_custom_call.1} parent=35 // pred_fallthru
          _
        %s332 = sand.u32 %s29, 1
        %s333 = scalar_lea.sflag [#allocation6], %s332
        %s334 = sand.u32 %s88, 1
        %s335 = smul.addr %s334, 32
        %s336 = scalar_lea.vmem [#allocation5], %s335
        // Predicated region
        $region41: #{tpu_custom_call.1} parent=35 // pred_check
          %p337 = pneg %p101
        $region42: #{tpu_custom_call.1} parent=35 // pred_check_branch
          %339 = sbr.rel (%p337) target = $region44
        $region43: #{tpu_custom_call.1} parent=35 // pred_region
          %340 = dma.done %s333, 512
        $region44: #{tpu_custom_call.1} parent=35 // pred_fallthru
          _
        %s341 = sand.u32 %s29, 1
        %s342 = scalar_lea.sflag [#allocation6], %s341
        %s343 = sand.u32 %s116, 1
        %s344 = smul.addr %s343, 32
        %s345 = scalar_lea.vmem [#allocation7], %s344
        // Predicated region
        $region45: #{tpu_custom_call.1} parent=35 // pred_check
          %p346 = pneg %p129
        $region46: #{tpu_custom_call.1} parent=35 // pred_check_branch
          %348 = sbr.rel (%p346) target = $region48
        $region47: #{tpu_custom_call.1} parent=35 // pred_region
          %349 = dma.done %s342, 512
        $region48: #{tpu_custom_call.1} parent=35 // pred_fallthru
          _
        %s350 = sand.u32 %s60, 1
        %s351 = scalar_lea.sflag [#allocation3], %s350
        %s352 = sand.u32 %s60, 1
        %s353 = smul.addr %s352, 32
        %s354 = scalar_lea.vmem [#allocation2], %s353
        %p355 = pneg %p73
        %p356 = pneg %p70
        %s357 = sand.u32 %s29, 1
        %s358 = scalar_lea.sflag [#allocation6], %s357
        %s359 = sand.u32 %s88, 1
        %s360 = smul.addr %s359, 32
        %s361 = scalar_lea.vmem [#allocation5], %s360
        %p362 = pneg %p101
        %p363 = pneg %p98
        %s364 = sand.u32 %s29, 1
        %s365 = scalar_lea.sflag [#allocation6], %s364
        %s366 = sand.u32 %s116, 1
        %s367 = smul.addr %s366, 32
        %s368 = scalar_lea.vmem [#allocation7], %s367
        %p369 = pneg %p129
        %p370 = pneg %p126
        %p371 = scmp.lt.s32.totalorder %s34, 1
        %s372 = scalar_select %p371, %s34, 1
        %p373 = scmp.lt.s32.totalorder %s36, 0
        %s374 = scalar_select %p373, %s36, 0
        %s375 = sadd.s32 %s374, %s372
        %s376 = smul.addr %s375, 2
        %s377 = scalar_lea.vmem %s3, %s376
        %p378 = pneg %p157
        %p379 = pneg %p154
        %p380 = pneg %p187
        %p381 = pneg %p184
        %s382 = sand.u32 %s174, 1
        %s383 = scalar_lea.sflag [#allocation4], %s382
        %s384 = sand.u32 %s174, 1
        %s385 = smul.addr %s384, 32
        %s386 = scalar_lea.vmem [#allocation8], %s385
        %p387 = pneg %p217
        %p388 = pneg %p214
        %s389 = sand.u32 %s204, 1
        %s390 = scalar_lea.sflag [#allocation10], %s389
        %s391 = sand.u32 %s204, 1
        %s392 = smul.addr %s391, 32
        %s393 = scalar_lea.vmem [#allocation9], %s392
        %s394 = smul.u32 4, %s35
        %s395 = smul.u32 4, %s35
        %s396 = smul.u32 4, %s35
        %p397 = scmp.lt.s32.totalorder %s34, 1
        %s398 = scalar_select %p397, %s34, 1
        %p399 = scmp.lt.s32.totalorder %s36, 0
        %s400 = scalar_select %p399, %s36, 0
        %s401 = sadd.s32 %s400, %s398
        %s402 = smul.addr %s401, 2
        %s403 = scalar_lea.vmem %s3, %s402
        %s404 = smul.u32 4, %s35
        %s405 = smul.u32 4, %s35
        %v408 = vld [vmem:[%s327] sm:$0xff]
        %v409 = vld [vmem:[%s327 + $0x8] sm:$0xff]
        %v410 = vld [vmem:[%s327 + $0x10] sm:$0xff]
        %v411 = vld [vmem:[%s327 + $0x18] sm:$0xff]
        %v412 = vld [vmem:[%s336] sm:$0xff]
        %v413 = vld [vmem:[%s336 + $0x8] sm:$0xff]
        %v414 = vld [vmem:[%s336 + $0x10] sm:$0xff]
        %v415 = vld [vmem:[%s336 + $0x18] sm:$0xff]
        %v416 = vld [vmem:[%s345] sm:$0xff]
        %v417 = vld [vmem:[%s345 + $0x8] sm:$0xff]
        %v418 = vld [vmem:[%s345 + $0x10] sm:$0xff]
        %v419 = vld [vmem:[%s345 + $0x18] sm:$0xff]
        %vm420 = vcmask 261120
        %v422 = vsel %vm420, %v408, 0
        %v425 = vsel %vm420, %v412, 0
        %427 = vmatprep.subr.mxu0 0.0
        %428 = vmatpush1.xpose.msra.mxu0 %v425
        %429 = vmatprep.subr.mxu0 0.0
        %430 = vmatpush1.xpose.msra.mxu0 0.0
        %431 = vmatprep.subr.mxu0 0.0
        %432 = vmatpush1.xpose.msra.mxu0 0.0
        %433 = vmatprep.subr.mxu0 0.0
        %434 = vmatpush1.xpose.msra.mxu0 0.0
        %435 = vmatprep.subr.mxu0 0.0
        %436 = vmatpush1.xpose.msra.mxu0 0.0
        %437 = vmatprep.subr.mxu0 0.0
        %438 = vmatpush1.xpose.msra.mxu0 0.0
        %439 = vmatprep.subr.mxu0 0.0
        %440 = vmatpush1.xpose.msra.mxu0 0.0
        %441 = vmatprep.subr.mxu0 0.0
        %442 = vmatpush1.xpose.msra.mxu0 0.0
        %443 = vmatprep.subr.mxu0 0.0
        %444 = vmatpush1.xpose.msra.mxu0 0.0
        %445 = vmatprep.subr.mxu0 0.0
        %446 = vmatpush1.xpose.msra.mxu0 0.0
        %447 = vmatprep.subr.mxu0 0.0
        %448 = vmatpush1.xpose.msra.mxu0 0.0
        %449 = vmatprep.subr.mxu0 0.0
        %450 = vmatpush1.xpose.msra.mxu0 0.0
        %451 = vmatprep.subr.mxu0 0.0
        %452 = vmatpush1.xpose.msra.mxu0 0.0
        %453 = vmatprep.subr.mxu0 0.0
        %454 = vmatpush1.xpose.msra.mxu0 0.0
        %455 = vmatprep.subr.mxu0 0.0
        %456 = vmatpush1.xpose.msra.mxu0 0.0
        %457 = vmatprep.subr.mxu0 0.0
        %458 = vmatpush1.xpose.msra.mxu0 0.0
        %459 = vmatprep.subr.mxu0 0.0
        %460 = vmatpush1.xpose.msra.mxu0 0.0
        %461 = vmatprep.subr.mxu0 0.0
        %462 = vmatpush1.xpose.msra.mxu0 0.0
        %463 = vmatprep.subr.mxu0 0.0
        %464 = vmatpush1.xpose.msra.mxu0 0.0
        %465 = vmatprep.subr.mxu0 0.0
        %466 = vmatpush1.xpose.msra.mxu0 0.0
        %467 = vmatprep.subr.mxu0 0.0
        %468 = vmatpush1.xpose.msra.mxu0 0.0
        %469 = vmatprep.subr.mxu0 0.0
        %470 = vmatpush1.xpose.msra.mxu0 0.0
        %471 = vmatprep.subr.mxu0 0.0
        %472 = vmatpush1.xpose.msra.mxu0 0.0
        %473 = vmatprep.subr.mxu0 0.0
        %474 = vmatpush1.xpose.msra.mxu0 0.0
        %475 = vmatprep.subr.mxu0 0.0
        %476 = vmatpush1.xpose.msra.mxu0 0.0
        %477 = vmatprep.subr.mxu0 0.0
        %478 = vmatpush1.xpose.msra.mxu0 0.0
        %479 = vmatprep.subr.mxu0 0.0
        %480 = vmatpush1.xpose.msra.mxu0 0.0
        %481 = vmatprep.subr.mxu0 0.0
        %482 = vmatpush1.xpose.msra.mxu0 0.0
        %483 = vmatprep.subr.mxu0 0.0
        %484 = vmatpush1.xpose.msra.mxu0 0.0
        %485 = vmatprep.subr.mxu0 0.0
        %486 = vmatpush1.xpose.msra.mxu0 0.0
        %487 = vmatprep.subr.mxu0 0.0
        %488 = vmatpush1.xpose.msra.mxu0 0.0
        %489 = vmatprep.subr.mxu0 0.0
        %490 = vmatpush1.xpose.msra.mxu0 0.0
        %491 = vmatprep.mubr.f32.mxu0 0.0
        %492 = vmatmul.mubr.f32.gmra.mrb[0].mxu0 %v422
        %v493 = vpop.f32.mrb[0].mxu0
        %v494 = vadd.f32 0.0, %v493
        %v495 = vpop.f32.mrb[0].mxu0
        %496 = vdwg.mxu0
        %v498 = vsel %vm420, %v409, 0
        %v501 = vsel %vm420, %v413, 0
        %503 = vmatprep.subr.mxu0 0.0
        %504 = vmatpush1.xpose.msra.mxu0 %v501
        %505 = vmatprep.subr.mxu0 0.0
        %506 = vmatpush1.xpose.msra.mxu0 0.0
        %507 = vmatprep.subr.mxu0 0.0
        %508 = vmatpush1.xpose.msra.mxu0 0.0
        %509 = vmatprep.subr.mxu0 0.0
        %510 = vmatpush1.xpose.msra.mxu0 0.0
        %511 = vmatprep.subr.mxu0 0.0
        %512 = vmatpush1.xpose.msra.mxu0 0.0
        %513 = vmatprep.subr.mxu0 0.0
        %514 = vmatpush1.xpose.msra.mxu0 0.0
        %515 = vmatprep.subr.mxu0 0.0
        %516 = vmatpush1.xpose.msra.mxu0 0.0
        %517 = vmatprep.subr.mxu0 0.0
        %518 = vmatpush1.xpose.msra.mxu0 0.0
        %519 = vmatprep.subr.mxu0 0.0
        %520 = vmatpush1.xpose.msra.mxu0 0.0
        %521 = vmatprep.subr.mxu0 0.0
        %522 = vmatpush1.xpose.msra.mxu0 0.0
        %523 = vmatprep.subr.mxu0 0.0
        %524 = vmatpush1.xpose.msra.mxu0 0.0
        %525 = vmatprep.subr.mxu0 0.0
        %526 = vmatpush1.xpose.msra.mxu0 0.0
        %527 = vmatprep.subr.mxu0 0.0
        %528 = vmatpush1.xpose.msra.mxu0 0.0
        %529 = vmatprep.subr.mxu0 0.0
        %530 = vmatpush1.xpose.msra.mxu0 0.0
        %531 = vmatprep.subr.mxu0 0.0
        %532 = vmatpush1.xpose.msra.mxu0 0.0
        %533 = vmatprep.subr.mxu0 0.0
        %534 = vmatpush1.xpose.msra.mxu0 0.0
        %535 = vmatprep.subr.mxu0 0.0
        %536 = vmatpush1.xpose.msra.mxu0 0.0
        %537 = vmatprep.subr.mxu0 0.0
        %538 = vmatpush1.xpose.msra.mxu0 0.0
        %539 = vmatprep.subr.mxu0 0.0
        %540 = vmatpush1.xpose.msra.mxu0 0.0
        %541 = vmatprep.subr.mxu0 0.0
        %542 = vmatpush1.xpose.msra.mxu0 0.0
        %543 = vmatprep.subr.mxu0 0.0
        %544 = vmatpush1.xpose.msra.mxu0 0.0
        %545 = vmatprep.subr.mxu0 0.0
        %546 = vmatpush1.xpose.msra.mxu0 0.0
        %547 = vmatprep.subr.mxu0 0.0
        %548 = vmatpush1.xpose.msra.mxu0 0.0
        %549 = vmatprep.subr.mxu0 0.0
        %550 = vmatpush1.xpose.msra.mxu0 0.0
        %551 = vmatprep.subr.mxu0 0.0
        %552 = vmatpush1.xpose.msra.mxu0 0.0
        %553 = vmatprep.subr.mxu0 0.0
        %554 = vmatpush1.xpose.msra.mxu0 0.0
        %555 = vmatprep.subr.mxu0 0.0
        %556 = vmatpush1.xpose.msra.mxu0 0.0
        %557 = vmatprep.subr.mxu0 0.0
        %558 = vmatpush1.xpose.msra.mxu0 0.0
        %559 = vmatprep.subr.mxu0 0.0
        %560 = vmatpush1.xpose.msra.mxu0 0.0
        %561 = vmatprep.subr.mxu0 0.0
        %562 = vmatpush1.xpose.msra.mxu0 0.0
        %563 = vmatprep.subr.mxu0 0.0
        %564 = vmatpush1.xpose.msra.mxu0 0.0
        %565 = vmatprep.subr.mxu0 0.0
        %566 = vmatpush1.xpose.msra.mxu0 0.0
        %567 = vmatprep.mubr.f32.mxu0 0.0
        %568 = vmatmul.mubr.f32.gmra.mrb[0].mxu0 %v498
        %v569 = vpop.f32.mrb[0].mxu0
        %v570 = vadd.f32 0.0, %v569
        %v571 = vpop.f32.mrb[0].mxu0
        %572 = vdwg.mxu0
        %v574 = vsel %vm420, %v410, 0
        %v577 = vsel %vm420, %v414, 0
        %579 = vmatprep.subr.mxu0 0.0
        %580 = vmatpush1.xpose.msra.mxu0 %v577
        %581 = vmatprep.subr.mxu0 0.0
        %582 = vmatpush1.xpose.msra.mxu0 0.0
        %583 = vmatprep.subr.mxu0 0.0
        %584 = vmatpush1.xpose.msra.mxu0 0.0
        %585 = vmatprep.subr.mxu0 0.0
        %586 = vmatpush1.xpose.msra.mxu0 0.0
        %587 = vmatprep.subr.mxu0 0.0
        %588 = vmatpush1.xpose.msra.mxu0 0.0
        %589 = vmatprep.subr.mxu0 0.0
        %590 = vmatpush1.xpose.msra.mxu0 0.0
        %591 = vmatprep.subr.mxu0 0.0
        %592 = vmatpush1.xpose.msra.mxu0 0.0
        %593 = vmatprep.subr.mxu0 0.0
        %594 = vmatpush1.xpose.msra.mxu0 0.0
        %595 = vmatprep.subr.mxu0 0.0
        %596 = vmatpush1.xpose.msra.mxu0 0.0
        %597 = vmatprep.subr.mxu0 0.0
        %598 = vmatpush1.xpose.msra.mxu0 0.0
        %599 = vmatprep.subr.mxu0 0.0
        %600 = vmatpush1.xpose.msra.mxu0 0.0
        %601 = vmatprep.subr.mxu0 0.0
        %602 = vmatpush1.xpose.msra.mxu0 0.0
        %603 = vmatprep.subr.mxu0 0.0
        %604 = vmatpush1.xpose.msra.mxu0 0.0
        %605 = vmatprep.subr.mxu0 0.0
        %606 = vmatpush1.xpose.msra.mxu0 0.0
        %607 = vmatprep.subr.mxu0 0.0
        %608 = vmatpush1.xpose.msra.mxu0 0.0
        %609 = vmatprep.subr.mxu0 0.0
        %610 = vmatpush1.xpose.msra.mxu0 0.0
        %611 = vmatprep.subr.mxu0 0.0
        %612 = vmatpush1.xpose.msra.mxu0 0.0
        %613 = vmatprep.subr.mxu0 0.0
        %614 = vmatpush1.xpose.msra.mxu0 0.0
        %615 = vmatprep.subr.mxu0 0.0
        %616 = vmatpush1.xpose.msra.mxu0 0.0
        %617 = vmatprep.subr.mxu0 0.0
        %618 = vmatpush1.xpose.msra.mxu0 0.0
        %619 = vmatprep.subr.mxu0 0.0
        %620 = vmatpush1.xpose.msra.mxu0 0.0
        %621 = vmatprep.subr.mxu0 0.0
        %622 = vmatpush1.xpose.msra.mxu0 0.0
        %623 = vmatprep.subr.mxu0 0.0
        %624 = vmatpush1.xpose.msra.mxu0 0.0
        %625 = vmatprep.subr.mxu0 0.0
        %626 = vmatpush1.xpose.msra.mxu0 0.0
        %627 = vmatprep.subr.mxu0 0.0
        %628 = vmatpush1.xpose.msra.mxu0 0.0
        %629 = vmatprep.subr.mxu0 0.0
        %630 = vmatpush1.xpose.msra.mxu0 0.0
        %631 = vmatprep.subr.mxu0 0.0
        %632 = vmatpush1.xpose.msra.mxu0 0.0
        %633 = vmatprep.subr.mxu0 0.0
        %634 = vmatpush1.xpose.msra.mxu0 0.0
        %635 = vmatprep.subr.mxu0 0.0
        %636 = vmatpush1.xpose.msra.mxu0 0.0
        %637 = vmatprep.subr.mxu0 0.0
        %638 = vmatpush1.xpose.msra.mxu0 0.0
        %639 = vmatprep.subr.mxu0 0.0
        %640 = vmatpush1.xpose.msra.mxu0 0.0
        %641 = vmatprep.subr.mxu0 0.0
        %642 = vmatpush1.xpose.msra.mxu0 0.0
        %643 = vmatprep.mubr.f32.mxu0 0.0
        %644 = vmatmul.mubr.f32.gmra.mrb[0].mxu0 %v574
        %v645 = vpop.f32.mrb[0].mxu0
        %v646 = vadd.f32 0.0, %v645
        %v647 = vpop.f32.mrb[0].mxu0
        %648 = vdwg.mxu0
        %v650 = vsel %vm420, %v411, 0
        %v653 = vsel %vm420, %v415, 0
        %655 = vmatprep.subr.mxu0 0.0
        %656 = vmatpush1.xpose.msra.mxu0 %v653
        %657 = vmatprep.subr.mxu0 0.0
        %658 = vmatpush1.xpose.msra.mxu0 0.0
        %659 = vmatprep.subr.mxu0 0.0
        %660 = vmatpush1.xpose.msra.mxu0 0.0
        %661 = vmatprep.subr.mxu0 0.0
        %662 = vmatpush1.xpose.msra.mxu0 0.0
        %663 = vmatprep.subr.mxu0 0.0
        %664 = vmatpush1.xpose.msra.mxu0 0.0
        %665 = vmatprep.subr.mxu0 0.0
        %666 = vmatpush1.xpose.msra.mxu0 0.0
        %667 = vmatprep.subr.mxu0 0.0
        %668 = vmatpush1.xpose.msra.mxu0 0.0
        %669 = vmatprep.subr.mxu0 0.0
        %670 = vmatpush1.xpose.msra.mxu0 0.0
        %671 = vmatprep.subr.mxu0 0.0
        %672 = vmatpush1.xpose.msra.mxu0 0.0
        %673 = vmatprep.subr.mxu0 0.0
        %674 = vmatpush1.xpose.msra.mxu0 0.0
        %675 = vmatprep.subr.mxu0 0.0
        %676 = vmatpush1.xpose.msra.mxu0 0.0
        %677 = vmatprep.subr.mxu0 0.0
        %678 = vmatpush1.xpose.msra.mxu0 0.0
        %679 = vmatprep.subr.mxu0 0.0
        %680 = vmatpush1.xpose.msra.mxu0 0.0
        %681 = vmatprep.subr.mxu0 0.0
        %682 = vmatpush1.xpose.msra.mxu0 0.0
        %683 = vmatprep.subr.mxu0 0.0
        %684 = vmatpush1.xpose.msra.mxu0 0.0
        %685 = vmatprep.subr.mxu0 0.0
        %686 = vmatpush1.xpose.msra.mxu0 0.0
        %687 = vmatprep.subr.mxu0 0.0
        %688 = vmatpush1.xpose.msra.mxu0 0.0
        %689 = vmatprep.subr.mxu0 0.0
        %690 = vmatpush1.xpose.msra.mxu0 0.0
        %691 = vmatprep.subr.mxu0 0.0
        %692 = vmatpush1.xpose.msra.mxu0 0.0
        %693 = vmatprep.subr.mxu0 0.0
        %694 = vmatpush1.xpose.msra.mxu0 0.0
        %695 = vmatprep.subr.mxu0 0.0
        %696 = vmatpush1.xpose.msra.mxu0 0.0
        %697 = vmatprep.subr.mxu0 0.0
        %698 = vmatpush1.xpose.msra.mxu0 0.0
        %699 = vmatprep.subr.mxu0 0.0
        %700 = vmatpush1.xpose.msra.mxu0 0.0
        %701 = vmatprep.subr.mxu0 0.0
        %702 = vmatpush1.xpose.msra.mxu0 0.0
        %703 = vmatprep.subr.mxu0 0.0
        %704 = vmatpush1.xpose.msra.mxu0 0.0
        %705 = vmatprep.subr.mxu0 0.0
        %706 = vmatpush1.xpose.msra.mxu0 0.0
        %707 = vmatprep.subr.mxu0 0.0
        %708 = vmatpush1.xpose.msra.mxu0 0.0
        %709 = vmatprep.subr.mxu0 0.0
        %710 = vmatpush1.xpose.msra.mxu0 0.0
        %711 = vmatprep.subr.mxu0 0.0
        %712 = vmatpush1.xpose.msra.mxu0 0.0
        %713 = vmatprep.subr.mxu0 0.0
        %714 = vmatpush1.xpose.msra.mxu0 0.0
        %715 = vmatprep.subr.mxu0 0.0
        %716 = vmatpush1.xpose.msra.mxu0 0.0
        %717 = vmatprep.subr.mxu0 0.0
        %718 = vmatpush1.xpose.msra.mxu0 0.0
        %719 = vmatprep.mubr.f32.mxu0 0.0
        %720 = vmatmul.mubr.f32.gmra.mrb[0].mxu0 %v650
        %v721 = vpop.f32.mrb[0].mxu0
        %v722 = vadd.f32 0.0, %v721
        %v723 = vpop.f32.mrb[0].mxu0
        %724 = vdwg.mxu0
        %v725 = vmul.f32 %v494, 0.17677669
        %v726 = vmul.f32 %v570, 0.17677669
        %v727 = vmul.f32 %v646, 0.17677669
        %v728 = vmul.f32 %v722, 0.17677669
        %v729 = vld [vmem:[%s403] sm:$0x3]
        %vm730 = vnez %v729
        %v731 = vsel %vm730, 16843009, 0
        %v732 = vunpack.c.0.s8 %v731
        %vm733 = vcmp.ne.s32.totalorder %v732, 0
        %v734 = vsel %vm733, 1, 0
        %vm735 = vcmp.eq.s32.totalorder %v734, 1
        %v736 = vsel %vm735, -1e+09, %v725
        %v737 = vsel %vm735, -1e+09, %v726
        %v738 = vsel %vm735, -1e+09, %v727
        %v739 = vsel %vm735, -1e+09, %v728
        %vm740 = vcmask 64512
        %v741 = vsel %vm740, %v736, -inf
        %742 = vmax.xlane.f32.xlu0 %v741
        %v743 = vpop.xlane.xlu0 %742
        %v744 = vsel %vm740, %v737, -inf
        %745 = vmax.xlane.f32.xlu0 %v744
        %v746 = vpop.xlane.xlu0 %745
        %v747 = vsel %vm740, %v738, -inf
        %748 = vmax.xlane.f32.xlu0 %v747
        %v749 = vpop.xlane.xlu0 %748
        %v750 = vsel %vm740, %v739, -inf
        %751 = vmax.xlane.f32.xlu0 %v750
        %v752 = vpop.xlane.xlu0 %751
        %v753 = vsub.f32 %v736, %v743
        %v754 = vsub.f32 %v737, %v746
        %v755 = vsub.f32 %v738, %v749
        %v756 = vsub.f32 %v739, %v752
        %v757 = vmul.f32 %v753, 1.442695
        %v758 = vpow.pop %v757
        %v759 = vmul.f32 %v754, 1.442695
        %v760 = vpow.pop %v759
        %v761 = vmul.f32 %v755, 1.442695
        %v762 = vpow.pop %v761
        %v763 = vmul.f32 %v756, 1.442695
        %v764 = vpow.pop %v763
        %v765 = vsel %vm740, %v758, 0.0
        %766 = vadd.xlane.f32.xlu0 %v765
        %v767 = vpop.xlane.xlu0 %766
        %v768 = vsel %vm740, %v760, 0.0
        %769 = vadd.xlane.f32.xlu0 %v768
        %v770 = vpop.xlane.xlu0 %769
        %v771 = vsel %vm740, %v762, 0.0
        %772 = vadd.xlane.f32.xlu0 %v771
        %v773 = vpop.xlane.xlu0 %772
        %v774 = vsel %vm740, %v764, 0.0
        %775 = vadd.xlane.f32.xlu0 %v774
        %v776 = vpop.xlane.xlu0 %775
        %v777 = vrcp.pop %v767
        %v778 = vmul.f32 1.0, %v777
        %v779 = vrcp.pop %v770
        %v780 = vmul.f32 1.0, %v779
        %v781 = vrcp.pop %v773
        %v782 = vmul.f32 1.0, %v781
        %v783 = vrcp.pop %v776
        %v784 = vmul.f32 1.0, %v783
        %v785 = vmul.f32 %v758, %v778
        %v786 = vmul.f32 %v760, %v780
        %v787 = vmul.f32 %v762, %v782
        %v788 = vmul.f32 %v764, %v784
        %789 = vst.msk [vmem:[%s393] sm:$0xff] %vm740, %v785
        %790 = vst.msk [vmem:[%s393 + $0x8] sm:$0xff] %vm740, %v786
        %791 = vst.msk [vmem:[%s393 + $0x10] sm:$0xff] %vm740, %v787
        %792 = vst.msk [vmem:[%s393 + $0x18] sm:$0xff] %vm740, %v788
        %v794 = vsel %vm740, %v785, 0
        %796 = vmatprep.subr.mxu0 0.0
        %797 = vmatpush1.msra.mxu0 %v416
        %798 = vmatprep.subr.mxu0 0.0
        %799 = vmatpush1.msra.mxu0 0.0
        %800 = vmatprep.subr.mxu0 0.0
        %801 = vmatpush1.msra.mxu0 0.0
        %802 = vmatprep.subr.mxu0 0.0
        %803 = vmatpush1.msra.mxu0 0.0
        %804 = vmatprep.subr.mxu0 0.0
        %805 = vmatpush1.msra.mxu0 0.0
        %806 = vmatprep.subr.mxu0 0.0
        %807 = vmatpush1.msra.mxu0 0.0
        %808 = vmatprep.subr.mxu0 0.0
        %809 = vmatpush1.msra.mxu0 0.0
        %810 = vmatprep.subr.mxu0 0.0
        %811 = vmatpush1.msra.mxu0 0.0
        %812 = vmatprep.subr.mxu0 0.0
        %813 = vmatpush1.msra.mxu0 0.0
        %814 = vmatprep.subr.mxu0 0.0
        %815 = vmatpush1.msra.mxu0 0.0
        %816 = vmatprep.subr.mxu0 0.0
        %817 = vmatpush1.msra.mxu0 0.0
        %818 = vmatprep.subr.mxu0 0.0
        %819 = vmatpush1.msra.mxu0 0.0
        %820 = vmatprep.subr.mxu0 0.0
        %821 = vmatpush1.msra.mxu0 0.0
        %822 = vmatprep.subr.mxu0 0.0
        %823 = vmatpush1.msra.mxu0 0.0
        %824 = vmatprep.subr.mxu0 0.0
        %825 = vmatpush1.msra.mxu0 0.0
        %826 = vmatprep.subr.mxu0 0.0
        %827 = vmatpush1.msra.mxu0 0.0
        %828 = vmatprep.subr.mxu0 0.0
        %829 = vmatpush1.msra.mxu0 0.0
        %830 = vmatprep.subr.mxu0 0.0
        %831 = vmatpush1.msra.mxu0 0.0
        %832 = vmatprep.subr.mxu0 0.0
        %833 = vmatpush1.msra.mxu0 0.0
        %834 = vmatprep.subr.mxu0 0.0
        %835 = vmatpush1.msra.mxu0 0.0
        %836 = vmatprep.subr.mxu0 0.0
        %837 = vmatpush1.msra.mxu0 0.0
        %838 = vmatprep.subr.mxu0 0.0
        %839 = vmatpush1.msra.mxu0 0.0
        %840 = vmatprep.subr.mxu0 0.0
        %841 = vmatpush1.msra.mxu0 0.0
        %842 = vmatprep.subr.mxu0 0.0
        %843 = vmatpush1.msra.mxu0 0.0
        %844 = vmatprep.subr.mxu0 0.0
        %845 = vmatpush1.msra.mxu0 0.0
        %846 = vmatprep.subr.mxu0 0.0
        %847 = vmatpush1.msra.mxu0 0.0
        %848 = vmatprep.subr.mxu0 0.0
        %849 = vmatpush1.msra.mxu0 0.0
        %850 = vmatprep.subr.mxu0 0.0
        %851 = vmatpush1.msra.mxu0 0.0
        %852 = vmatprep.subr.mxu0 0.0
        %853 = vmatpush1.msra.mxu0 0.0
        %854 = vmatprep.subr.mxu0 0.0
        %855 = vmatpush1.msra.mxu0 0.0
        %856 = vmatprep.subr.mxu0 0.0
        %857 = vmatpush1.msra.mxu0 0.0
        %858 = vmatprep.subr.mxu0 0.0
        %859 = vmatpush1.msra.mxu0 0.0
        %860 = vmatprep.mubr.f32.mxu0 0.0
        %861 = vmatmul.mubr.f32.gmra.mrb[0].mxu0 %v794
        %v862 = vpop.f32.mrb[0].mxu0
        %v863 = vadd.f32 0.0, %v862
        %v864 = vpop.f32.mrb[0].mxu0
        %865 = vdwg.mxu0
        %v867 = vsel %vm740, %v786, 0
        %869 = vmatprep.subr.mxu0 0.0
        %870 = vmatpush1.msra.mxu0 %v417
        %871 = vmatprep.subr.mxu0 0.0
        %872 = vmatpush1.msra.mxu0 0.0
        %873 = vmatprep.subr.mxu0 0.0
        %874 = vmatpush1.msra.mxu0 0.0
        %875 = vmatprep.subr.mxu0 0.0
        %876 = vmatpush1.msra.mxu0 0.0
        %877 = vmatprep.subr.mxu0 0.0
        %878 = vmatpush1.msra.mxu0 0.0
        %879 = vmatprep.subr.mxu0 0.0
        %880 = vmatpush1.msra.mxu0 0.0
        %881 = vmatprep.subr.mxu0 0.0
        %882 = vmatpush1.msra.mxu0 0.0
        %883 = vmatprep.subr.mxu0 0.0
        %884 = vmatpush1.msra.mxu0 0.0
        %885 = vmatprep.subr.mxu0 0.0
        %886 = vmatpush1.msra.mxu0 0.0
        %887 = vmatprep.subr.mxu0 0.0
        %888 = vmatpush1.msra.mxu0 0.0
        %889 = vmatprep.subr.mxu0 0.0
        %890 = vmatpush1.msra.mxu0 0.0
        %891 = vmatprep.subr.mxu0 0.0
        %892 = vmatpush1.msra.mxu0 0.0
        %893 = vmatprep.subr.mxu0 0.0
        %894 = vmatpush1.msra.mxu0 0.0
        %895 = vmatprep.subr.mxu0 0.0
        %896 = vmatpush1.msra.mxu0 0.0
        %897 = vmatprep.subr.mxu0 0.0
        %898 = vmatpush1.msra.mxu0 0.0
        %899 = vmatprep.subr.mxu0 0.0
        %900 = vmatpush1.msra.mxu0 0.0
        %901 = vmatprep.subr.mxu0 0.0
        %902 = vmatpush1.msra.mxu0 0.0
        %903 = vmatprep.subr.mxu0 0.0
        %904 = vmatpush1.msra.mxu0 0.0
        %905 = vmatprep.subr.mxu0 0.0
        %906 = vmatpush1.msra.mxu0 0.0
        %907 = vmatprep.subr.mxu0 0.0
        %908 = vmatpush1.msra.mxu0 0.0
        %909 = vmatprep.subr.mxu0 0.0
        %910 = vmatpush1.msra.mxu0 0.0
        %911 = vmatprep.subr.mxu0 0.0
        %912 = vmatpush1.msra.mxu0 0.0
        %913 = vmatprep.subr.mxu0 0.0
        %914 = vmatpush1.msra.mxu0 0.0
        %915 = vmatprep.subr.mxu0 0.0
        %916 = vmatpush1.msra.mxu0 0.0
        %917 = vmatprep.subr.mxu0 0.0
        %918 = vmatpush1.msra.mxu0 0.0
        %919 = vmatprep.subr.mxu0 0.0
        %920 = vmatpush1.msra.mxu0 0.0
        %921 = vmatprep.subr.mxu0 0.0
        %922 = vmatpush1.msra.mxu0 0.0
        %923 = vmatprep.subr.mxu0 0.0
        %924 = vmatpush1.msra.mxu0 0.0
        %925 = vmatprep.subr.mxu0 0.0
        %926 = vmatpush1.msra.mxu0 0.0
        %927 = vmatprep.subr.mxu0 0.0
        %928 = vmatpush1.msra.mxu0 0.0
        %929 = vmatprep.subr.mxu0 0.0
        %930 = vmatpush1.msra.mxu0 0.0
        %931 = vmatprep.subr.mxu0 0.0
        %932 = vmatpush1.msra.mxu0 0.0
        %933 = vmatprep.mubr.f32.mxu0 0.0
        %934 = vmatmul.mubr.f32.gmra.mrb[0].mxu0 %v867
        %v935 = vpop.f32.mrb[0].mxu0
        %v936 = vadd.f32 0.0, %v935
        %v937 = vpop.f32.mrb[0].mxu0
        %938 = vdwg.mxu0
        %v940 = vsel %vm740, %v787, 0
        %942 = vmatprep.subr.mxu0 0.0
        %943 = vmatpush1.msra.mxu0 %v418
        %944 = vmatprep.subr.mxu0 0.0
        %945 = vmatpush1.msra.mxu0 0.0
        %946 = vmatprep.subr.mxu0 0.0
        %947 = vmatpush1.msra.mxu0 0.0
        %948 = vmatprep.subr.mxu0 0.0
        %949 = vmatpush1.msra.mxu0 0.0
        %950 = vmatprep.subr.mxu0 0.0
        %951 = vmatpush1.msra.mxu0 0.0
        %952 = vmatprep.subr.mxu0 0.0
        %953 = vmatpush1.msra.mxu0 0.0
        %954 = vmatprep.subr.mxu0 0.0
        %955 = vmatpush1.msra.mxu0 0.0
        %956 = vmatprep.subr.mxu0 0.0
        %957 = vmatpush1.msra.mxu0 0.0
        %958 = vmatprep.subr.mxu0 0.0
        %959 = vmatpush1.msra.mxu0 0.0
        %960 = vmatprep.subr.mxu0 0.0
        %961 = vmatpush1.msra.mxu0 0.0
        %962 = vmatprep.subr.mxu0 0.0
        %963 = vmatpush1.msra.mxu0 0.0
        %964 = vmatprep.subr.mxu0 0.0
        %965 = vmatpush1.msra.mxu0 0.0
        %966 = vmatprep.subr.mxu0 0.0
        %967 = vmatpush1.msra.mxu0 0.0
        %968 = vmatprep.subr.mxu0 0.0
        %969 = vmatpush1.msra.mxu0 0.0
        %970 = vmatprep.subr.mxu0 0.0
        %971 = vmatpush1.msra.mxu0 0.0
        %972 = vmatprep.subr.mxu0 0.0
        %973 = vmatpush1.msra.mxu0 0.0
        %974 = vmatprep.subr.mxu0 0.0
        %975 = vmatpush1.msra.mxu0 0.0
        %976 = vmatprep.subr.mxu0 0.0
        %977 = vmatpush1.msra.mxu0 0.0
        %978 = vmatprep.subr.mxu0 0.0
        %979 = vmatpush1.msra.mxu0 0.0
        %980 = vmatprep.subr.mxu0 0.0
        %981 = vmatpush1.msra.mxu0 0.0
        %982 = vmatprep.subr.mxu0 0.0
        %983 = vmatpush1.msra.mxu0 0.0
        %984 = vmatprep.subr.mxu0 0.0
        %985 = vmatpush1.msra.mxu0 0.0
        %986 = vmatprep.subr.mxu0 0.0
        %987 = vmatpush1.msra.mxu0 0.0
        %988 = vmatprep.subr.mxu0 0.0
        %989 = vmatpush1.msra.mxu0 0.0
        %990 = vmatprep.subr.mxu0 0.0
        %991 = vmatpush1.msra.mxu0 0.0
        %992 = vmatprep.subr.mxu0 0.0
        %993 = vmatpush1.msra.mxu0 0.0
        %994 = vmatprep.subr.mxu0 0.0
        %995 = vmatpush1.msra.mxu0 0.0
        %996 = vmatprep.subr.mxu0 0.0
        %997 = vmatpush1.msra.mxu0 0.0
        %998 = vmatprep.subr.mxu0 0.0
        %999 = vmatpush1.msra.mxu0 0.0
        %1000 = vmatprep.subr.mxu0 0.0
        %1001 = vmatpush1.msra.mxu0 0.0
        %1002 = vmatprep.subr.mxu0 0.0
        %1003 = vmatpush1.msra.mxu0 0.0
        %1004 = vmatprep.subr.mxu0 0.0
        %1005 = vmatpush1.msra.mxu0 0.0
        %1006 = vmatprep.mubr.f32.mxu0 0.0
        %1007 = vmatmul.mubr.f32.gmra.mrb[0].mxu0 %v940
        %v1008 = vpop.f32.mrb[0].mxu0
        %v1009 = vadd.f32 0.0, %v1008
        %v1010 = vpop.f32.mrb[0].mxu0
        %1011 = vdwg.mxu0
        %v1013 = vsel %vm740, %v788, 0
        %1015 = vmatprep.subr.mxu0 0.0
        %1016 = vmatpush1.msra.mxu0 %v419
        %1017 = vmatprep.subr.mxu0 0.0
        %1018 = vmatpush1.msra.mxu0 0.0
        %1019 = vmatprep.subr.mxu0 0.0
        %1020 = vmatpush1.msra.mxu0 0.0
        %1021 = vmatprep.subr.mxu0 0.0
        %1022 = vmatpush1.msra.mxu0 0.0
        %1023 = vmatprep.subr.mxu0 0.0
        %1024 = vmatpush1.msra.mxu0 0.0
        %1025 = vmatprep.subr.mxu0 0.0
        %1026 = vmatpush1.msra.mxu0 0.0
        %1027 = vmatprep.subr.mxu0 0.0
        %1028 = vmatpush1.msra.mxu0 0.0
        %1029 = vmatprep.subr.mxu0 0.0
        %1030 = vmatpush1.msra.mxu0 0.0
        %1031 = vmatprep.subr.mxu0 0.0
        %1032 = vmatpush1.msra.mxu0 0.0
        %1033 = vmatprep.subr.mxu0 0.0
        %1034 = vmatpush1.msra.mxu0 0.0
        %1035 = vmatprep.subr.mxu0 0.0
        %1036 = vmatpush1.msra.mxu0 0.0
        %1037 = vmatprep.subr.mxu0 0.0
        %1038 = vmatpush1.msra.mxu0 0.0
        %1039 = vmatprep.subr.mxu0 0.0
        %1040 = vmatpush1.msra.mxu0 0.0
        %1041 = vmatprep.subr.mxu0 0.0
        %1042 = vmatpush1.msra.mxu0 0.0
        %1043 = vmatprep.subr.mxu0 0.0
        %1044 = vmatpush1.msra.mxu0 0.0
        %1045 = vmatprep.subr.mxu0 0.0
        %1046 = vmatpush1.msra.mxu0 0.0
        %1047 = vmatprep.subr.mxu0 0.0
        %1048 = vmatpush1.msra.mxu0 0.0
        %1049 = vmatprep.subr.mxu0 0.0
        %1050 = vmatpush1.msra.mxu0 0.0
        %1051 = vmatprep.subr.mxu0 0.0
        %1052 = vmatpush1.msra.mxu0 0.0
        %1053 = vmatprep.subr.mxu0 0.0
        %1054 = vmatpush1.msra.mxu0 0.0
        %1055 = vmatprep.subr.mxu0 0.0
        %1056 = vmatpush1.msra.mxu0 0.0
        %1057 = vmatprep.subr.mxu0 0.0
        %1058 = vmatpush1.msra.mxu0 0.0
        %1059 = vmatprep.subr.mxu0 0.0
        %1060 = vmatpush1.msra.mxu0 0.0
        %1061 = vmatprep.subr.mxu0 0.0
        %1062 = vmatpush1.msra.mxu0 0.0
        %1063 = vmatprep.subr.mxu0 0.0
        %1064 = vmatpush1.msra.mxu0 0.0
        %1065 = vmatprep.subr.mxu0 0.0
        %1066 = vmatpush1.msra.mxu0 0.0
        %1067 = vmatprep.subr.mxu0 0.0
        %1068 = vmatpush1.msra.mxu0 0.0
        %1069 = vmatprep.subr.mxu0 0.0
        %1070 = vmatpush1.msra.mxu0 0.0
        %1071 = vmatprep.subr.mxu0 0.0
        %1072 = vmatpush1.msra.mxu0 0.0
        %1073 = vmatprep.subr.mxu0 0.0
        %1074 = vmatpush1.msra.mxu0 0.0
        %1075 = vmatprep.subr.mxu0 0.0
        %1076 = vmatpush1.msra.mxu0 0.0
        %1077 = vmatprep.subr.mxu0 0.0
        %1078 = vmatpush1.msra.mxu0 0.0
        %1079 = vmatprep.mubr.f32.mxu0 0.0
        %1080 = vmatmul.mubr.f32.gmra.mrb[0].mxu0 %v1013
        %v1081 = vpop.f32.mrb[0].mxu0
        %v1082 = vadd.f32 0.0, %v1081
        %v1083 = vpop.f32.mrb[0].mxu0
        %1084 = vdwg.mxu0
        %1085 = vst.msk [vmem:[%s386] sm:$0xff] %vm420, %v863
        %1086 = vst.msk [vmem:[%s386 + $0x8] sm:$0xff] %vm420, %v936
        %1087 = vst.msk [vmem:[%s386 + $0x10] sm:$0xff] %vm420, %v1009
        %1088 = vst.msk [vmem:[%s386 + $0x18] sm:$0xff] %vm420, %v1082
        %s1089 = sand.u32 %s174, 1
        %s1090 = scalar_lea.sflag [#allocation4], %s1089
        %s1091 = sand.u32 %s174, 1
        %s1092 = smul.addr %s1091, 32
        %s1093 = scalar_lea.vmem [#allocation8], %s1092
        %s1094 = sand.u32 %s204, 1
        %s1095 = scalar_lea.sflag [#allocation10], %s1094
        %s1096 = sand.u32 %s204, 1
        %s1097 = smul.addr %s1096, 32
        %s1098 = scalar_lea.vmem [#allocation9], %s1097
        // Predicated region
        $region49: #{tpu_custom_call.1} parent=35 // pred_check
          %p1099 = pneg %p184
        $region50: #{tpu_custom_call.1} parent=35 // pred_check_branch
          %1101 = sbr.rel (%p1099) target = $region52
        $region51: #{tpu_custom_call.1} parent=35 // pred_region
          %s1102 = smul.u32 4, %s35
          %s1104 = ssub.s32 512, 512
          %1105 = vsyncadd %s1090, %s1104
          %s1106 = sadd.s32 %s36, %s1102
          %s1107 = smul.addr %s34, 4
          %s1108 = sadd.s32 %s1106, %s1107
          %s1109 = smul.addr %s1108, 128
          %s1110 = scalar_lea.hbm %s4, %s1109
          %s1111 = sshll.u32 %s1093, 4
          %s1112 = int_to_ptr.vmem [resolvable:$true] %s1111
          %1117 = dma.vmem_to_hbm [thread:$0]  %s1112, 512, %s1110, %s1090, 128, 128, 8
        $region52: #{tpu_custom_call.1} parent=35 // pred_fallthru
          _
        // Predicated region
        $region53: #{tpu_custom_call.1} parent=35 // pred_check
          %p1118 = pneg %p214
        $region54: #{tpu_custom_call.1} parent=35 // pred_check_branch
          %1120 = sbr.rel (%p1118) target = $region56
        $region55: #{tpu_custom_call.1} parent=35 // pred_region
          %s1121 = smul.u32 4, %s35
          %s1123 = ssub.s32 512, 512
          %1124 = vsyncadd %s1095, %s1123
          %s1125 = sadd.s32 %s36, %s1121
          %s1126 = smul.addr %s34, 4
          %s1127 = sadd.s32 %s1125, %s1126
          %s1128 = smul.addr %s1127, 128
          %s1129 = scalar_lea.hbm %s5, %s1128
          %s1130 = sshll.u32 %s1098, 4
          %s1131 = int_to_ptr.vmem [resolvable:$true] %s1130
          %1136 = dma.vmem_to_hbm [thread:$0]  %s1131, 512, %s1129, %s1095, 128, 128, 8
        $region56: #{tpu_custom_call.1} parent=35 // pred_fallthru
          _
      $region36: #{tpu_custom_call.1} parent=5 // pred_fallthru
        _
      %p1137 = scmp.le.s32.totalorder 2, %s24
      // Predicated region
      $region57: #{tpu_custom_call.1} parent=5 // pred_check
        %p1138 = pneg %p1137
      $region58: #{tpu_custom_call.1} parent=5 // pred_check_branch
        %1140 = sbr.rel (%p1138) target = $region60
      $region59: #{tpu_custom_call.1} parent=5 // pred_region
        %s1141 = ssub.s32 %s24, 2
        // Predicated region
        $region61: #{tpu_custom_call.1} parent=59 // pred_check
          %p1142 = pneg %p190
        $region62: #{tpu_custom_call.1} parent=59 // pred_check_branch
          %1144 = sbr.rel (%p1142) target = $region64
        $region63: #{tpu_custom_call.1} parent=59 // pred_region
          %s1145 = sand.u32 %s175, 1
          %s1146 = scalar_lea.sflag [#allocation4], %s1145
          %s1147 = sand.u32 %s175, 1
          %s1148 = smul.addr %s1147, 32
          %s1149 = scalar_lea.vmem [#allocation8], %s1148
          %1150 = dma.done %s1146, 512
        $region64: #{tpu_custom_call.1} parent=59 // pred_fallthru
          _
        // Predicated region
        $region65: #{tpu_custom_call.1} parent=59 // pred_check
          %p1151 = pneg %p220
        $region66: #{tpu_custom_call.1} parent=59 // pred_check_branch
          %1153 = sbr.rel (%p1151) target = $region68
        $region67: #{tpu_custom_call.1} parent=59 // pred_region
          %s1154 = sand.u32 %s205, 1
          %s1155 = scalar_lea.sflag [#allocation10], %s1154
          %s1156 = sand.u32 %s205, 1
          %s1157 = smul.addr %s1156, 32
          %s1158 = scalar_lea.vmem [#allocation9], %s1157
          %1159 = dma.done %s1155, 512
        $region68: #{tpu_custom_call.1} parent=59 // pred_fallthru
          _
      $region60: #{tpu_custom_call.1} parent=5 // pred_fallthru
        _
    $region6: #{tpu_custom_call.1} parent=1 // loop_footer
      %s28 = sadd.s32 1, %s24
    $region7: #{tpu_custom_call.1} parent=1 // loop_footer_branch
      %23 = sbr.rel target = $region3
    $region8: #{tpu_custom_call.1} parent=1 // loop_exit
      _
    %1160 = vsyncpa [#allocation3], 1
    %s1161 = scalar_lea.sflag [#allocation3], 1
    %1162 = vsyncpa %s1161, 1
    %1163 = vsyncpa [#allocation6], 1
    %s1164 = scalar_lea.sflag [#allocation6], 1
    %1165 = vsyncpa %s1164, 1
    %1166 = vsyncpa [#allocation4], 1
    %s1167 = scalar_lea.sflag [#allocation4], 1
    %1168 = vsyncpa %s1167, 1
    %1169 = vsyncpa [#allocation10], 1
    %s1170 = scalar_lea.sflag [#allocation10], 1
    %1171 = vsyncpa %s1170, 1

</llo_original>
